<compile_context>
chip_gen: v7x
topology: tpu7x:2x2x1
jax: 0.10.0
libtpu: 0.0.40
codegen_flags: <defaults>
</compile_context>

<pallas_src>
import functools

import jax
import jax.numpy as jnp
from jax.experimental import pallas as pl
from jax.experimental.pallas import tpu as pltpu

_SUBLANES = 8
_LANES = 128
_MIN_BLOCK = _SUBLANES * _LANES          # 1024 keypoints = one fully dense vreg
_DEFAULT_MAX_TILE_N = 32 * 1024          # keypoints per grid step
_DEFAULT_MIN_PALLAS_N = 4096             # below this, fused XLA beats dispatch


def _depth_smooth_kernel(*refs, tb2, ts2, scale_s, has_validity, d_dim):
    if has_validity:
        pred_ref, depth_ref, valid_ref, out_ref = refs
    else:
        pred_ref, depth_ref, out_ref = refs
        valid_ref = None

    p = pred_ref[...].astype(jnp.float32)     # (D, 8, L)
    z = depth_ref[...].astype(jnp.float32)    # (D, 8, L)

    # Unrolled coordinate reduction: dense VALU mul/adds, no cross-sublane XLU.
    sq = (z[0] - p[0]) * (z[0] - p[0])
    for d in range(1, d_dim):
        sq = sq + (z[d] - p[d]) * (z[d] - p[d])

    if has_validity:
        v = valid_ref[...].astype(jnp.float32)   # (8, L); constant over D
        sq = sq * v

    # Branch on squared distance: keeps sqrt off the compare path. Padded /
    # invalid / exactly-matching keypoints have sq == 0 < tb2 -> "below".
    below = sq < tb2
    above = sq > ts2

    # diff**0.1 == sq**0.05 via EUP log/exp (a few ULPs from torch.pow).
    d_pow = jnp.exp(0.05 * jnp.log(jnp.maximum(sq, 1e-30)))
    d_pow = jnp.where(sq > 0.0, d_pow, 0.0)      # torch.pow(0., 0.1) == 0
    d_mid = jnp.sqrt(sq)                          # middle branch only

    diff_c = jnp.where(below, d_pow, jnp.where(above, d_pow * scale_s, d_mid))
    if has_validity:
        valid_c = jnp.where(below, 0.0, v)
    else:
        valid_c = jnp.where(below, 0.0, 1.0)

    # Per-tile partial sums (lane-reduced to (8,1)); the tiny cross-tile
    # reduce + divide happens in the fused wrapper epilogue.
    out_ref[0, 0] = jnp.sum(diff_c, axis=1, keepdims=True)
    out_ref[0, 1] = jnp.sum(valid_c, axis=1, keepdims=True)


def _reference(keypoints_pred, keypoints_depth, keypoints_binary_validity=None,
               threshold_b=500, threshold_s=1500):
    """Pure-jnp transcription of the PyTorch forward (also the small-N path)."""
    keypoints_pred = jnp.asarray(keypoints_pred)
    keypoints_depth = jnp.asarray(keypoints_depth)
    if keypoints_binary_validity is None:
        keypoints_binary_validity = jnp.ones(
            (*keypoints_depth.shape[:-1], 1), dtype=jnp.float32)
    keypoints_binary_validity = jnp.asarray(keypoints_binary_validity,
                                            dtype=jnp.float32)
    diff = jnp.sqrt(jnp.sum(
        (keypoints_depth - keypoints_pred) ** 2 * keypoints_binary_validity,
        axis=-1))
    below = diff < threshold_b
    above = diff > threshold_s
    dpow = jnp.where(diff > 0,
                     jnp.power(jnp.maximum(diff, 1e-30), 0.1), 0.0)
    diff_c = jnp.where(below, dpow,
                       jnp.where(above, dpow * float(threshold_s) ** 0.9, diff))
    valid_c = jnp.where(below, 0.0, keypoints_binary_validity[..., 0])
    return jnp.sum(diff_c) / jnp.maximum(1.0, jnp.sum(valid_c))


def depth_smooth_loss(keypoints_pred, keypoints_depth,
                      keypoints_binary_validity=None,
                      threshold_b=500, threshold_s=1500,
                      *, min_pallas_keypoints=_DEFAULT_MIN_PALLAS_N,
                      max_tile_n=_DEFAULT_MAX_TILE_N):
    """JAX/Pallas equivalent of DepthSmoothLoss.forward."""
    keypoints_pred = jnp.asarray(keypoints_pred)
    keypoints_depth = jnp.asarray(keypoints_depth)
    has_validity = keypoints_binary_validity is not None

    d_dim = keypoints_depth.shape[-1]
    pred2 = keypoints_pred.reshape(-1, d_dim)
    depth2 = keypoints_depth.reshape(-1, d_dim)
    n = depth2.shape[0]

    if n < min_pallas_keypoints:
        # Tiny inputs: one fused XLA expression beats a pallas_call dispatch.
        return _reference(keypoints_pred, keypoints_depth,
                          keypoints_binary_validity, threshold_b, threshold_s)

    # Sublane+lane-dense padding / tiling of the keypoint axis.
    max_tile_n = max(_MIN_BLOCK, (max_tile_n // _MIN_BLOCK) * _MIN_BLOCK)
    n_dense = pl.cdiv(n, _MIN_BLOCK) * _MIN_BLOCK
    tile_n = min(n_dense, max_tile_n)
    n_pad = pl.cdiv(n, tile_n) * tile_n
    num_tiles = n_pad // tile_n
    lanes = tile_n // _SUBLANES            # multiple of 128 by construction

    def to_slab(x2):  # (n, D) -> (D, 8, n_pad/8), zero-padded keypoints
        if n_pad != n:
            x2 = jnp.pad(x2, ((0, n_pad - n), (0, 0)))
        return x2.T.reshape(d_dim, _SUBLANES, n_pad // _SUBLANES)

    args = [to_slab(pred2), to_slab(depth2)]
    in_specs = [
        pl.BlockSpec((d_dim, _SUBLANES, lanes), lambda i: (0, 0, i)),
        pl.BlockSpec((d_dim, _SUBLANES, lanes), lambda i: (0, 0, i)),
    ]
    if has_validity:
        valid1 = jnp.asarray(keypoints_binary_validity,
                             dtype=jnp.float32).reshape(-1)
        valid_slab = jnp.pad(valid1, (0, n_pad - n)).reshape(
            _SUBLANES, n_pad // _SUBLANES)
        args.append(valid_slab)
        in_specs.append(pl.BlockSpec((_SUBLANES, lanes), lambda i: (0, i)))

    kernel = functools.partial(
        _depth_smooth_kernel,
        tb2=float(threshold_b) ** 2,
        ts2=float(threshold_s) ** 2,
        scale_s=float(threshold_s) ** 0.9,
        has_validity=has_validity,
        d_dim=d_dim,
    )

    partials = pl.pallas_call(
        kernel,
        out_shape=jax.ShapeDtypeStruct((num_tiles, 2, _SUBLANES, 1),
                                       jnp.float32),
        grid=(num_tiles,),
        in_specs=in_specs,
        out_specs=pl.BlockSpec((1, 2, _SUBLANES, 1), lambda i: (i, 0, 0, 0)),
        compiler_params=pltpu.CompilerParams(
            dimension_semantics=("parallel",)),
    )(*args)

    sums = jnp.sum(partials, axis=(0, 2, 3))   # (2,): [sum diff_c, sum valid_c]
    return sums[0] / jnp.maximum(jnp.float32(1.0), sums[1])


if __name__ == "__main__":
    key = jax.random.PRNGKey(0)
    k1, k2, k3, k4, k5, k6 = jax.random.split(key, 6)

    # Jit the wrapper so the pad/transpose plumbing fuses with the pallas_call;
    # force the Pallas path so the kernel is exercised at these small shapes.
    pallas_loss = jax.jit(functools.partial(depth_smooth_loss,
                                            min_pallas_keypoints=0))
    pallas_loss_2tiles = jax.jit(functools.partial(depth_smooth_loss,
                                                   min_pallas_keypoints=0,
                                                   max_tile_n=1024))

    # --- Cases 1/2: tiny (B=2, J=8, D=3), all three branches exercised. ---
    B, J, D = 2, 8, 3
    pred = jax.random.normal(k1, (B, J, D), dtype=jnp.float32) * 100.0
    mags = jnp.array([50.0, 300.0, 700.0, 1200.0, 1800.0, 2500.0, 10.0, 900.0],
                     dtype=jnp.float32)
    direction = jax.random.normal(k2, (B, J, D), dtype=jnp.float32)
    direction = direction / jnp.linalg.norm(direction, axis=-1, keepdims=True)
    depth = pred + direction * mags[None, :, None]
    validity = (jax.random.uniform(k3, (B, J, 1)) > 0.2).astype(jnp.float32)

    loss1 = jax.block_until_ready(pallas_loss(pred, depth, validity))
    ref1 = _reference(pred, depth, validity)
    assert jnp.allclose(loss1, ref1, rtol=1e-4, atol=1e-4), (loss1, ref1)

    loss2 = jax.block_until_ready(pallas_loss(pred, depth, None))
    ref2 = _reference(pred, depth)
    assert jnp.allclose(loss2, ref2, rtol=1e-4, atol=1e-4), (loss2, ref2)

    # --- Case 3: B=2, J=1024 -> 2048 keypoints, with 1024-keypoint tiles so
    # the multi-tile "parallel" grid path (and zero-padding-free path) runs. ---
    B3, J3 = 2, 1024
    pred3 = jax.random.normal(k4, (B3, J3, D), dtype=jnp.float32) * 100.0
    mags3 = jax.random.uniform(k5, (B3, J3), minval=0.0, maxval=3000.0)
    dir3 = jax.random.normal(k6, (B3, J3, D), dtype=jnp.float32)
    dir3 = dir3 / jnp.linalg.norm(dir3, axis=-1, keepdims=True)
    depth3 = pred3 + dir3 * mags3[..., None]
    validity3 = (jax.random.uniform(k3, (B3, J3, 1)) > 0.3).astype(jnp.float32)

    loss3 = jax.block_until_ready(pallas_loss_2tiles(pred3, depth3, validity3))
    ref3 = _reference(pred3, depth3, validity3)
    assert jnp.allclose(loss3, ref3, rtol=1e-4, atol=1e-4), (loss3, ref3)

    print("KERNEL_OK")
</pallas_src>

<mosaic_0001>
module attributes {stable_mosaic.version = 11 : i64} {
  func.func @_depth_smooth_kernel(%arg0: i32, %arg1: memref<3x8x128xf32, #tpu.memory_space<vmem>>, %arg2: memref<3x8x128xf32, #tpu.memory_space<vmem>>, %arg3: memref<8x128xf32, #tpu.memory_space<vmem>>, %arg4: memref<1x2x8x1xf32, #tpu.memory_space<vmem>>) attributes {dimension_semantics = [#tpu.dimension_semantics<parallel>], iteration_bounds = array<i64: 1>, scalar_prefetch = 0 : i64, scratch_operands = 0 : i64, tpu.core_type = #tpu.core_type<tc>, window_params = [{transform_indices = @transform_0, window_bounds = array<i64: 3, 8, 128>}, {transform_indices = @transform_1, window_bounds = array<i64: 3, 8, 128>}, {transform_indices = @transform_2, window_bounds = array<i64: 8, 128>}, {transform_indices = @transform_3, window_bounds = array<i64: 1, 2, 8, 1>}]} {
    %c0 = arith.constant 0 : index
    %c0_0 = arith.constant 0 : index
    %c0_1 = arith.constant 0 : index
    %0 = vector.load %arg1[%c0, %c0_0, %c0_1] : memref<3x8x128xf32, #tpu.memory_space<vmem>>, vector<3x8x128xf32>
    %c0_2 = arith.constant 0 : index
    %c0_3 = arith.constant 0 : index
    %c0_4 = arith.constant 0 : index
    %1 = vector.load %arg2[%c0_2, %c0_3, %c0_4] : memref<3x8x128xf32, #tpu.memory_space<vmem>>, vector<3x8x128xf32>
    %2 = vector.extract_strided_slice %1 {offsets = [0, 0, 0], sizes = [1, 8, 128], strides = [1, 1, 1]} : vector<3x8x128xf32> to vector<1x8x128xf32>
    %3 = vector.shape_cast %2 : vector<1x8x128xf32> to vector<8x128xf32>
    %4 = vector.extract_strided_slice %0 {offsets = [0, 0, 0], sizes = [1, 8, 128], strides = [1, 1, 1]} : vector<3x8x128xf32> to vector<1x8x128xf32>
    %5 = vector.shape_cast %4 : vector<1x8x128xf32> to vector<8x128xf32>
    %6 = arith.subf %3, %5 : vector<8x128xf32>
    %7 = vector.extract_strided_slice %1 {offsets = [0, 0, 0], sizes = [1, 8, 128], strides = [1, 1, 1]} : vector<3x8x128xf32> to vector<1x8x128xf32>
    %8 = vector.shape_cast %7 : vector<1x8x128xf32> to vector<8x128xf32>
    %9 = vector.extract_strided_slice %0 {offsets = [0, 0, 0], sizes = [1, 8, 128], strides = [1, 1, 1]} : vector<3x8x128xf32> to vector<1x8x128xf32>
    %10 = vector.shape_cast %9 : vector<1x8x128xf32> to vector<8x128xf32>
    %11 = arith.subf %8, %10 : vector<8x128xf32>
    %12 = arith.mulf %6, %11 : vector<8x128xf32>
    %13 = vector.extract_strided_slice %1 {offsets = [1, 0, 0], sizes = [1, 8, 128], strides = [1, 1, 1]} : vector<3x8x128xf32> to vector<1x8x128xf32>
    %14 = vector.shape_cast %13 : vector<1x8x128xf32> to vector<8x128xf32>
    %15 = vector.extract_strided_slice %0 {offsets = [1, 0, 0], sizes = [1, 8, 128], strides = [1, 1, 1]} : vector<3x8x128xf32> to vector<1x8x128xf32>
    %16 = vector.shape_cast %15 : vector<1x8x128xf32> to vector<8x128xf32>
    %17 = arith.subf %14, %16 : vector<8x128xf32>
    %18 = vector.extract_strided_slice %1 {offsets = [1, 0, 0], sizes = [1, 8, 128], strides = [1, 1, 1]} : vector<3x8x128xf32> to vector<1x8x128xf32>
    %19 = vector.shape_cast %18 : vector<1x8x128xf32> to vector<8x128xf32>
    %20 = vector.extract_strided_slice %0 {offsets = [1, 0, 0], sizes = [1, 8, 128], strides = [1, 1, 1]} : vector<3x8x128xf32> to vector<1x8x128xf32>
    %21 = vector.shape_cast %20 : vector<1x8x128xf32> to vector<8x128xf32>
    %22 = arith.subf %19, %21 : vector<8x128xf32>
    %23 = arith.mulf %17, %22 : vector<8x128xf32>
    %24 = arith.addf %12, %23 : vector<8x128xf32>
    %25 = vector.extract_strided_slice %1 {offsets = [2, 0, 0], sizes = [1, 8, 128], strides = [1, 1, 1]} : vector<3x8x128xf32> to vector<1x8x128xf32>
    %26 = vector.shape_cast %25 : vector<1x8x128xf32> to vector<8x128xf32>
    %27 = vector.extract_strided_slice %0 {offsets = [2, 0, 0], sizes = [1, 8, 128], strides = [1, 1, 1]} : vector<3x8x128xf32> to vector<1x8x128xf32>
    %28 = vector.shape_cast %27 : vector<1x8x128xf32> to vector<8x128xf32>
    %29 = arith.subf %26, %28 : vector<8x128xf32>
    %30 = vector.extract_strided_slice %1 {offsets = [2, 0, 0], sizes = [1, 8, 128], strides = [1, 1, 1]} : vector<3x8x128xf32> to vector<1x8x128xf32>
    %31 = vector.shape_cast %30 : vector<1x8x128xf32> to vector<8x128xf32>
    %32 = vector.extract_strided_slice %0 {offsets = [2, 0, 0], sizes = [1, 8, 128], strides = [1, 1, 1]} : vector<3x8x128xf32> to vector<1x8x128xf32>
    %33 = vector.shape_cast %32 : vector<1x8x128xf32> to vector<8x128xf32>
    %34 = arith.subf %31, %33 : vector<8x128xf32>
    %35 = arith.mulf %29, %34 : vector<8x128xf32>
    %36 = arith.addf %24, %35 : vector<8x128xf32>
    %c0_5 = arith.constant 0 : index
    %c0_6 = arith.constant 0 : index
    %37 = vector.load %arg3[%c0_5, %c0_6] : memref<8x128xf32, #tpu.memory_space<vmem>>, vector<8x128xf32>
    %38 = arith.mulf %36, %37 : vector<8x128xf32>
    %cst = arith.constant 2.500000e+05 : f32
    %39 = vector.broadcast %cst : f32 to vector<8x128xf32>
    %40 = arith.cmpf olt, %38, %39 : vector<8x128xf32>
    %cst_7 = arith.constant 2.250000e+06 : f32
    %41 = vector.broadcast %cst_7 : f32 to vector<8x128xf32>
    %42 = arith.cmpf ogt, %38, %41 : vector<8x128xf32>
    %cst_8 = arith.constant 1.000000e-30 : f32
    %43 = vector.broadcast %cst_8 : f32 to vector<8x128xf32>
    %44 = arith.maximumf %38, %43 : vector<8x128xf32>
    %45 = math.log %44 : vector<8x128xf32>
    %cst_9 = arith.constant 5.000000e-02 : f32
    %46 = vector.broadcast %cst_9 : f32 to vector<8x128xf32>
    %47 = arith.mulf %46, %45 : vector<8x128xf32>
    %48 = math.exp %47 : vector<8x128xf32>
    %cst_10 = arith.constant 0.000000e+00 : f32
    %49 = vector.broadcast %cst_10 : f32 to vector<8x128xf32>
    %50 = arith.cmpf ogt, %38, %49 : vector<8x128xf32>
    %cst_11 = arith.constant 0.000000e+00 : f32
    %51 = vector.broadcast %cst_11 : f32 to vector<8x128xf32>
    %52 = arith.select %50, %48, %51 : vector<8x128xi1>, vector<8x128xf32>
    %53 = math.sqrt %38 : vector<8x128xf32>
    %cst_12 = arith.constant 721.908447 : f32
    %54 = vector.broadcast %cst_12 : f32 to vector<8x128xf32>
    %55 = arith.mulf %52, %54 : vector<8x128xf32>
    %56 = arith.select %42, %55, %53 : vector<8x128xi1>, vector<8x128xf32>
    %57 = arith.select %40, %52, %56 : vector<8x128xi1>, vector<8x128xf32>
    %cst_13 = arith.constant 0.000000e+00 : f32
    %58 = vector.broadcast %cst_13 : f32 to vector<8x128xf32>
    %59 = arith.select %40, %58, %37 : vector<8x128xi1>, vector<8x128xf32>
    %cst_14 = arith.constant dense<0.000000e+00> : vector<8xf32>
    %60 = vector.multi_reduction <add>, %57, %cst_14 [1] : vector<8x128xf32> to vector<8xf32>
    %61 = vector.shape_cast %60 : vector<8xf32> to vector<8x1xf32>
    %c0_15 = arith.constant 0 : index
    %c0_16 = arith.constant 0 : index
    %c0_17 = arith.constant 0 : index
    %c0_18 = arith.constant 0 : index
    %62 = vector.load %arg4[%c0_15, %c0_16, %c0_17, %c0_18] : memref<1x2x8x1xf32, #tpu.memory_space<vmem>>, vector<1x1x8x1xf32>
    %63 = vector.shape_cast %62 : vector<1x1x8x1xf32> to vector<8x1xf32>
    %64 = vector.shape_cast %61 : vector<8x1xf32> to vector<1x1x8x1xf32>
    tpu.vector_store %arg4[%c0_15, %c0_16, %c0_17, %c0_18], %64 {strides = array<i32>} : memref<1x2x8x1xf32, #tpu.memory_space<vmem>>, vector<1x1x8x1xf32>,
    %cst_19 = arith.constant dense<0.000000e+00> : vector<8xf32>
    %65 = vector.multi_reduction <add>, %59, %cst_19 [1] : vector<8x128xf32> to vector<8xf32>
    %66 = vector.shape_cast %65 : vector<8xf32> to vector<8x1xf32>
    %c0_20 = arith.constant 0 : index
    %c1 = arith.constant 1 : index
    %c0_21 = arith.constant 0 : index
    %c0_22 = arith.constant 0 : index
    %67 = vector.load %arg4[%c0_20, %c1, %c0_21, %c0_22] : memref<1x2x8x1xf32, #tpu.memory_space<vmem>>, vector<1x1x8x1xf32>
    %68 = vector.shape_cast %67 : vector<1x1x8x1xf32> to vector<8x1xf32>
    %69 = vector.shape_cast %66 : vector<8x1xf32> to vector<1x1x8x1xf32>
    tpu.vector_store %arg4[%c0_20, %c1, %c0_21, %c0_22], %69 {strides = array<i32>} : memref<1x2x8x1xf32, #tpu.memory_space<vmem>>, vector<1x1x8x1xf32>,
    return
  }
  func.func @transform_0(%arg0: i32) -> (i32, i32, i32) {
    %c0_i32 = arith.constant 0 : i32
    %c0_i32_0 = arith.constant 0 : i32
    %c0_i32_1 = arith.constant 0 : i32
    return %c0_i32, %c0_i32_0, %arg0 : i32, i32, i32
  }
  func.func @transform_1(%arg0: i32) -> (i32, i32, i32) {
    %c0_i32 = arith.constant 0 : i32
    %c0_i32_0 = arith.constant 0 : i32
    %c0_i32_1 = arith.constant 0 : i32
    return %c0_i32, %c0_i32_0, %arg0 : i32, i32, i32
  }
  func.func @transform_2(%arg0: i32) -> (i32, i32) {
    %c0_i32 = arith.constant 0 : i32
    %c0_i32_0 = arith.constant 0 : i32
    return %c0_i32, %arg0 : i32, i32
  }
  func.func @transform_3(%arg0: i32) -> (i32, i32, i32, i32) {
    %c0_i32 = arith.constant 0 : i32
    %c0_i32_0 = arith.constant 0 : i32
    %c0_i32_1 = arith.constant 0 : i32
    %c0_i32_2 = arith.constant 0 : i32
    return %arg0, %c0_i32, %c0_i32_0, %c0_i32_1 : i32, i32, i32, i32
  }
}

</mosaic_0001>

<llo_original>
// kernel: depth_smooth_loss.1
$region0: #{depth_smooth_loss.1}
  #allocation0 [shape = 'u32[]', space=smem, size = 0x4, offset = 0x4, fixed_abs, tag = 'smem constant byte address 0x4 - core index']
  #allocation1 [shape = 'u32[144,128]{1,0:T(1,128)}', space=vmem, size = 0x12000, scoped, tag = 'internal scratch']
  %s0 = inlined_call_operand.vmem [shape: f32[3,8,128], index: 0, kind: input, shape index: {}]
  %s1 = inlined_call_operand.vmem [shape: f32[3,8,128], index: 1, kind: input, shape index: {}]
  %s2 = inlined_call_operand.vmem [shape: f32[8,128], index: 2, kind: input, shape index: {}]
  %s3 = inlined_call_operand.vmem [shape: f32[1,2,8,1], index: 3, kind: output, shape index: {}]
  %s4 = sld [smem:[#allocation0]]
  $region22: #{depth_smooth_loss.1} parent=0
    _
  %s6 = ssub.s32 1, %s4
  %s7 = scalar_select 0, %s6, %s4
  // Predicated region
  $region2: #{depth_smooth_loss.1} parent=0 // pred_check
    _
  $region3: #{depth_smooth_loss.1} parent=0 // pred_check_branch
    %9 = sbr.rel (0) target = $region5
  $region4: #{depth_smooth_loss.1} parent=0 // pred_region
    _
  $region5: #{depth_smooth_loss.1} parent=0 // pred_fallthru
    _
  // Predicated region
  $region6: #{depth_smooth_loss.1} parent=0 // pred_check
    _
  $region7: #{depth_smooth_loss.1} parent=0 // pred_check_branch
    %11 = sbr.rel (0) target = $region9
  $region8: #{depth_smooth_loss.1} parent=0 // pred_region
    _
  $region9: #{depth_smooth_loss.1} parent=0 // pred_fallthru
    _
  // Predicated region
  $region10: #{depth_smooth_loss.1} parent=0 // pred_check
    _
  $region11: #{depth_smooth_loss.1} parent=0 // pred_check_branch
    %13 = sbr.rel (0) target = $region13
  $region12: #{depth_smooth_loss.1} parent=0 // pred_region
    _
  $region13: #{depth_smooth_loss.1} parent=0 // pred_fallthru
    _
  %v14 = vld [vmem:[%s0] sm:$0xff]
  %v15 = vld [vmem:[%s0 + $0x8] sm:$0xff]
  %v16 = vld [vmem:[%s0 + $0x10] sm:$0xff]
  %v17 = vld [vmem:[%s1] sm:$0xff]
  %v18 = vld [vmem:[%s1 + $0x8] sm:$0xff]
  %v19 = vld [vmem:[%s1 + $0x10] sm:$0xff]
  %v20 = vsub.f32 %v17, %v14
  %v21 = vmul.f32 %v20, %v20
  %v22 = vsub.f32 %v18, %v15
  %v23 = vmul.f32 %v22, %v22
  %v24 = vadd.f32 %v21, %v23
  %v25 = vsub.f32 %v19, %v16
  %v26 = vmul.f32 %v25, %v25
  %v27 = vadd.f32 %v24, %v26
  %v28 = vld [vmem:[%s2] sm:$0xff]
  %v29 = vmul.f32 %v27, %v28
  %vm30 = vcmp.lt.f32.partialorder %v29, 250000.0
  %vm31 = vcmp.gt.f32.partialorder %v29, 2250000.0
  %v32 = vmax.f32 %v29, 1e-30
  %v33 = vlog2.pop %v32
  %v34 = vmul.f32 %v33, 0.6931472
  %v35 = vmul.f32 %v34, 0.05
  %v36 = vmul.f32 %v35, 1.442695
  %v37 = vpow.pop %v36
  %vm38 = vcmp.gt.f32.partialorder %v29, 0.0
  %v39 = vsel %vm38, %v37, 0.0
  %v40 = vrsqrt.pop %v29
  %v41 = vmul.f32 %v29, %v40
  %vm42 = vcmp.eq.f32.partialorder %v29, inf
  %v43 = vsel %vm42, %v29, %v41
  %vm44 = vcmp.eq.f32.partialorder %v29, 0.0
  %v45 = vand.u32 %v29, 2147483648
  %v46 = vsel %vm44, %v45, %v43
  %v47 = vmul.f32 %v39, 721.90845
  %v48 = vsel %vm31, %v47, %v46
  %v49 = vsel %vm30, %v39, %v48
  %v50 = vsel %vm30, 0.0, %v28
  %51 = vadd.xlane.f32.xlu0 %v49
  %v52 = vpop.xlane.xlu0 %51
  %vm53 = vcmask 7168
  %54 = vst.msk [vmem:[%s3] sm:$0xff] %vm53, %v52
  %55 = vadd.xlane.f32.xlu0 %v50
  %v56 = vpop.xlane.xlu0 %55
  %s57 = scalar_lea.vmem %s3, 8
  %58 = vst.msk [vmem:[%s57] sm:$0xff] %vm53, %v56
  // Predicated region
  $region14: #{depth_smooth_loss.1} parent=0 // pred_check
    _
  $region15: #{depth_smooth_loss.1} parent=0 // pred_check_branch
    %60 = sbr.rel (0) target = $region17
  $region16: #{depth_smooth_loss.1} parent=0 // pred_region
    _
  $region17: #{depth_smooth_loss.1} parent=0 // pred_fallthru
    _
  // Predicated region
  $region18: #{depth_smooth_loss.1} parent=0 // pred_check
    _
  $region19: #{depth_smooth_loss.1} parent=0 // pred_check_branch
    %62 = sbr.rel (0) target = $region21
  $region20: #{depth_smooth_loss.1} parent=0 // pred_region
    _
  $region21: #{depth_smooth_loss.1} parent=0 // pred_fallthru
    _

</llo_original>
